<compile_context>
chip_gen: v7x
topology: tpu7x:2x2x1
jax: 0.10.0
libtpu: 0.0.40
codegen_flags: <defaults>
</compile_context>

<pallas_src>
import math
from functools import partial

import jax
import jax.numpy as jnp
from jax import lax
from jax.experimental import pallas as pl
from jax.experimental.pallas import tpu as pltpu

_INV_SQRT2 = 0.7071067811865476  # 1/sqrt(2): multiply instead of a vector divide
_LANE = 128
_SUBLANE = 8


def _cdiv(a, b):
    return -(-a // b)


def _round_up(v, m):
    return _cdiv(v, m) * m


def _gelu_exact(x):
    # nn.GELU() default = exact erf formulation (numeric parity with PyTorch).
    return 0.5 * x * (1.0 + lax.erf(x * _INV_SQRT2))


def _mlp_kernel(x_ref, w1_ref, b1_ref, w2_ref, b2_ref, o_ref, *, transpose_out):
    # x_ref:  (tile_m, C_in)   native dtype, fed straight to the MXU (no upcast)
    # w1_ref: (C_in, C_hid)    native dtype
    # b1_ref: (1, C_hid)       f32
    # w2_ref: (C_hid, Np)      native dtype (zero-padded cols when Np > target)
    # b2_ref: (1, Np)          f32
    # o_ref:  (target, tile_m) if transpose_out else (tile_m, target)
    h = jnp.dot(x_ref[...], w1_ref[...], preferred_element_type=jnp.float32)
    h = _gelu_exact(h + b1_ref[...])                       # f32 bias + exact GELU
    y = jnp.dot(h.astype(w2_ref.dtype), w2_ref[...],
                preferred_element_type=jnp.float32) + b2_ref[...]
    if transpose_out:
        # (tile_m, 128) -> (128, tile_m): per-row scalars move onto lanes so the
        # (target, tile_m) output block is written with dense vector stores
        # instead of 1/128-lane masked stores.  Np is a full lane tile, so this
        # is a native-shape f32 transpose (cheap XLU work, hidden by the x DMA).
        y = jnp.transpose(y)[: o_ref.shape[0], :]
    o_ref[...] = y.astype(o_ref.dtype)


def _pick_tile_m(m, c_in, c_hid, target, x_itemsize, w_itemsize, out_itemsize,
                 *, vmem_budget_bytes=16 << 20, min_steps=8,
                 min_x_block_bytes=1 << 20):
    """Padding-aware row-tile picker.

    Counts the padded VMEM footprint of every double-buffered block plus the
    f32 intermediates the kernel materializes, keeps the x block big enough to
    amortize the ~0.35us per-grid-step overhead, and leaves >= min_steps grid
    steps (>= 4 per v7x TensorCore) when M allows so the pipeline stays full.
    """
    c_in_p = _round_up(c_in, _LANE)
    c_hid_p = _round_up(c_hid, _LANE)
    n_p = _round_up(max(target, 1), _LANE)

    # Resident weight/bias blocks (constant index_map, still double-buffered).
    w_bytes = 2 * w_itemsize * (_round_up(c_in, _SUBLANE) * c_hid_p
                                + _round_up(c_hid, _SUBLANE) * n_p)
    w_bytes += 2 * 4 * _SUBLANE * (c_hid_p + n_p)          # f32 biases, padded

    # Output block bytes per tile row (padded, double-buffered).
    if target < _LANE:
        out_per_row = 2 * _round_up(target, _SUBLANE) * out_itemsize   # (t, tile_m)
    else:
        out_per_row = 2 * _round_up(target, _LANE) * out_itemsize      # (tile_m, t)

    # x block (double-buffered, lane-padded) + f32 intermediates (h, y, y^T).
    per_row = 2 * c_in_p * x_itemsize + out_per_row + 3 * max(c_hid_p, n_p) * 4

    cap = max(_LANE, ((vmem_budget_bytes - w_bytes) // per_row) // _LANE * _LANE)
    # Big enough x block to amortize per-step overhead ...
    floor_rows = _round_up(_cdiv(min_x_block_bytes, c_in_p * x_itemsize), _LANE)
    # ... but keep >= min_steps grid steps when M allows.
    want_rows = _round_up(_cdiv(m, min_steps), _LANE)
    tile = min(cap, max(floor_rows, want_rows))
    return max(_LANE, min(tile, _round_up(m, _LANE)))


def vqa_head_mlp(x, w1, b1, w2, b2, *, tile_m=None, vmem_limit_bytes=32 << 20):
    """Eval-mode VQAHeadMLP forward: fc2(gelu(fc1(x))); dropout = identity.

    x: (..., C_in);  w1: (C_in, C_hid);  b1: (C_hid,)/(1, C_hid);
    w2: (C_hid, target);  b2: (target,)/(1, target).
    """
    orig_shape = x.shape
    c_in = orig_shape[-1]
    x2d = x.reshape(-1, c_in)
    m = x2d.shape[0]
    c_hid = w1.shape[1]
    target = w2.shape[1]
    out_dtype = x.dtype

    if tile_m is None:
        tile_m = _pick_tile_m(m, c_in, c_hid, target,
                              x2d.dtype.itemsize, w1.dtype.itemsize,
                              x2d.dtype.itemsize)
    tile_m = max(_LANE, _round_up(tile_m, _LANE))
    grid_m = _cdiv(m, tile_m)   # ragged tail: OOB reads padded, OOB writes dropped

    b1k = b1.reshape(1, c_hid).astype(jnp.float32)
    compiler_params = pltpu.CompilerParams(
        dimension_semantics=("parallel",),
        vmem_limit_bytes=vmem_limit_bytes,
    )

    if target < _LANE:
        # Lane-dense output path: kernel writes a (target, tile_m) slab so the
        # last dim of the written block is the >=128 row tile, not `target`.
        n_p = _LANE
        w2k = jnp.zeros((c_hid, n_p), w2.dtype).at[:, :target].set(w2)
        b2k = jnp.zeros((1, n_p), jnp.float32).at[:, :target].set(
            b2.reshape(1, target).astype(jnp.float32))
        out_t = pl.pallas_call(
            partial(_mlp_kernel, transpose_out=True),
            out_shape=jax.ShapeDtypeStruct((target, m), out_dtype),
            grid_spec=pltpu.PrefetchScalarGridSpec(
                num_scalar_prefetch=0,
                grid=(grid_m,),
                in_specs=[
                    pl.BlockSpec((tile_m, c_in), lambda i: (i, 0)),
                    # Weights/biases: constant index_map -> VMEM-resident.
                    pl.BlockSpec((c_in, c_hid), lambda i: (0, 0)),
                    pl.BlockSpec((1, c_hid), lambda i: (0, 0)),
                    pl.BlockSpec((c_hid, n_p), lambda i: (0, 0)),
                    pl.BlockSpec((1, n_p), lambda i: (0, 0)),
                ],
                out_specs=pl.BlockSpec((target, tile_m), lambda i: (0, i)),
            ),
            compiler_params=compiler_params,
        )(x2d, w1, b1k, w2k, b2k)
        out2d = out_t.T   # (m, target); for target == 1 this is a free relayout
    else:
        # target >= one lane tile: the direct layout is already lane-dense.
        # TODO(synk): for very large target add an N-tiling grid axis so the
        # resident w2 / output block stay within VMEM on v7x.
        b2k = b2.reshape(1, target).astype(jnp.float32)
        out2d = pl.pallas_call(
            partial(_mlp_kernel, transpose_out=False),
            out_shape=jax.ShapeDtypeStruct((m, target), out_dtype),
            grid_spec=pltpu.PrefetchScalarGridSpec(
                num_scalar_prefetch=0,
                grid=(grid_m,),
                in_specs=[
                    pl.BlockSpec((tile_m, c_in), lambda i: (i, 0)),
                    pl.BlockSpec((c_in, c_hid), lambda i: (0, 0)),
                    pl.BlockSpec((1, c_hid), lambda i: (0, 0)),
                    pl.BlockSpec((c_hid, target), lambda i: (0, 0)),
                    pl.BlockSpec((1, target), lambda i: (0, 0)),
                ],
                out_specs=pl.BlockSpec((tile_m, target), lambda i: (i, 0)),
            ),
            compiler_params=compiler_params,
        )(x2d, w1, b1k, w2, b2k)

    return out2d.reshape(*orig_shape[:-1], target)


def init_params(key, in_channels, hidden_channels, target, dtype=jnp.float32):
    """Deterministic init mirroring nn.Linear's default uniform bounds."""
    k1, k2, k3, k4 = jax.random.split(key, 4)
    bound1 = 1.0 / math.sqrt(in_channels)
    bound2 = 1.0 / math.sqrt(hidden_channels)
    w1 = jax.random.uniform(k1, (in_channels, hidden_channels), dtype,
                            minval=-bound1, maxval=bound1)
    b1 = jax.random.uniform(k2, (1, hidden_channels), dtype,
                            minval=-bound1, maxval=bound1)
    w2 = jax.random.uniform(k3, (hidden_channels, target), dtype,
                            minval=-bound2, maxval=bound2)
    b2 = jax.random.uniform(k4, (1, target), dtype,
                            minval=-bound2, maxval=bound2)
    return w1, b1, w2, b2


if __name__ == "__main__":
    # Module defaults: in_channels=768, hidden_channels=64, target=1.
    batch, seq = 2, 8
    in_channels, hidden_channels, target = 768, 64, 1

    key = jax.random.PRNGKey(0)
    kx, kp = jax.random.split(key)
    x = jax.random.normal(kx, (batch, seq, in_channels), jnp.float32)
    w1, b1, w2, b2 = init_params(kp, in_channels, hidden_channels, target)

    def ref_fn(xv):
        h = jnp.dot(xv.astype(jnp.float32), w1, precision=lax.Precision.HIGHEST) + b1[0]
        h = jax.nn.gelu(h, approximate=False)
        return jnp.dot(h, w2, precision=lax.Precision.HIGHEST) + b2[0]

    out = jax.block_until_ready(vqa_head_mlp(x, w1, b1, w2, b2))
    ref = ref_fn(x)
    assert out.shape == (batch, seq, target), out.shape
    # Tolerance covers MXU pass-count differences vs the XLA reference matmul.
    assert jnp.allclose(out, ref, atol=5e-3, rtol=5e-3), float(
        jnp.max(jnp.abs(out - ref)))

    # Ragged / multi-tile M path (M = 1041, not a multiple of the row tile).
    x_big = jax.random.normal(kx, (3, 347, in_channels), jnp.float32)
    out_big = jax.block_until_ready(vqa_head_mlp(x_big, w1, b1, w2, b2))
    ref_big = ref_fn(x_big)
    assert out_big.shape == (3, 347, target), out_big.shape
    assert jnp.allclose(out_big, ref_big, atol=5e-3, rtol=5e-3), float(
        jnp.max(jnp.abs(out_big - ref_big)))

    # bf16 inputs/weights exercise the no-upcast MXU path (looser tolerance:
    # bf16 x bf16 -> f32 MXU accumulation + bf16 output rounding).
    out_bf16 = jax.block_until_ready(
        vqa_head_mlp(x.astype(jnp.bfloat16), w1.astype(jnp.bfloat16), b1,
                     w2.astype(jnp.bfloat16), b2))
    assert out_bf16.shape == (batch, seq, target), out_bf16.shape
    assert jnp.allclose(out_bf16.astype(jnp.float32), ref, atol=5e-2, rtol=5e-2), float(
        jnp.max(jnp.abs(out_bf16.astype(jnp.float32) - ref)))

    print("KERNEL_OK")
</pallas_src>

<mosaic_0001>
module attributes {stable_mosaic.version = 11 : i64} {
  func.func @_mlp_kernel(%arg0: i32, %arg1: memref<128x768xf32, #tpu.memory_space<vmem>>, %arg2: memref<768x64xf32, #tpu.memory_space<vmem>>, %arg3: memref<1x64xf32, #tpu.memory_space<vmem>>, %arg4: memref<64x128xf32, #tpu.memory_space<vmem>>, %arg5: memref<1x128xf32, #tpu.memory_space<vmem>>, %arg6: memref<1x128xf32, #tpu.memory_space<vmem>>) attributes {dimension_semantics = [#tpu.dimension_semantics<parallel>], iteration_bounds = array<i64: 1>, scalar_prefetch = 0 : i64, scratch_operands = 0 : i64, tpu.core_type = #tpu.core_type<tc>, window_params = [{transform_indices = @transform_0, window_bounds = array<i64: 128, 768>}, {pipeline_mode = #tpu.pipeline_mode<synchronous>, transform_indices = @transform_1, window_bounds = array<i64: 768, 64>}, {pipeline_mode = #tpu.pipeline_mode<synchronous>, transform_indices = @transform_2, window_bounds = array<i64: 1, 64>}, {pipeline_mode = #tpu.pipeline_mode<synchronous>, transform_indices = @transform_3, window_bounds = array<i64: 64, 128>}, {pipeline_mode = #tpu.pipeline_mode<synchronous>, transform_indices = @transform_4, window_bounds = array<i64: 1, 128>}, {transform_indices = @transform_5, window_bounds = array<i64: 1, 128>}]} {
    %c0 = arith.constant 0 : index
    %c0_0 = arith.constant 0 : index
    %0 = vector.load %arg1[%c0, %c0_0] : memref<128x768xf32, #tpu.memory_space<vmem>>, vector<128x768xf32>
    %c0_1 = arith.constant 0 : index
    %c0_2 = arith.constant 0 : index
    %1 = vector.load %arg2[%c0_1, %c0_2] : memref<768x64xf32, #tpu.memory_space<vmem>>, vector<768x64xf32>
    %cst = arith.constant dense<0.000000e+00> : vector<128x64xf32>
    %2 = tpu.matmul %0, %1, %cst {dimension_numbers = #tpu.dot_dimension_numbers<[1], [0], [0], [1], [0, 0, 1, 1], [], []>} : vector<128x768xf32>, vector<768x64xf32>, vector<128x64xf32> -> vector<128x64xf32>
    %c0_3 = arith.constant 0 : index
    %c0_4 = arith.constant 0 : index
    %3 = vector.load %arg3[%c0_3, %c0_4] : memref<1x64xf32, #tpu.memory_space<vmem>>, vector<1x64xf32>
    %4 = vector.broadcast %3 : vector<1x64xf32> to vector<128x64xf32>
    %5 = arith.addf %2, %4 : vector<128x64xf32>
    %cst_5 = arith.constant 5.000000e-01 : f32
    %6 = vector.broadcast %cst_5 : f32 to vector<128x64xf32>
    %7 = arith.mulf %6, %5 : vector<128x64xf32>
    %cst_6 = arith.constant 0.707106769 : f32
    %8 = vector.broadcast %cst_6 : f32 to vector<128x64xf32>
    %9 = arith.mulf %5, %8 : vector<128x64xf32>
    %10 = math.erf %9 : vector<128x64xf32>
    %cst_7 = arith.constant 1.000000e+00 : f32
    %11 = vector.broadcast %cst_7 : f32 to vector<128x64xf32>
    %12 = arith.addf %11, %10 : vector<128x64xf32>
    %13 = arith.mulf %7, %12 : vector<128x64xf32>
    %c0_8 = arith.constant 0 : index
    %c0_9 = arith.constant 0 : index
    %14 = vector.load %arg4[%c0_8, %c0_9] : memref<64x128xf32, #tpu.memory_space<vmem>>, vector<64x128xf32>
    %cst_10 = arith.constant dense<0.000000e+00> : vector<128x128xf32>
    %15 = tpu.matmul %13, %14, %cst_10 {dimension_numbers = #tpu.dot_dimension_numbers<[1], [0], [0], [1], [0, 0, 1, 1], [], []>} : vector<128x64xf32>, vector<64x128xf32>, vector<128x128xf32> -> vector<128x128xf32>
    %c0_11 = arith.constant 0 : index
    %c0_12 = arith.constant 0 : index
    %16 = vector.load %arg5[%c0_11, %c0_12] : memref<1x128xf32, #tpu.memory_space<vmem>>, vector<1x128xf32>
    %17 = vector.broadcast %16 : vector<1x128xf32> to vector<128x128xf32>
    %18 = arith.addf %15, %17 : vector<128x128xf32>
    %19 = tpu.transpose %18, [1, 0] : vector<128x128xf32> -> vector<128x128xf32>
    %20 = vector.extract_strided_slice %19 {offsets = [0, 0], sizes = [1, 128], strides = [1, 1]} : vector<128x128xf32> to vector<1x128xf32>
    %c0_13 = arith.constant 0 : index
    %c0_14 = arith.constant 0 : index
    %21 = vector.load %arg6[%c0_13, %c0_14] : memref<1x128xf32, #tpu.memory_space<vmem>>, vector<1x128xf32>
    tpu.vector_store %arg6[%c0_13, %c0_14], %20 {strides = array<i32>} : memref<1x128xf32, #tpu.memory_space<vmem>>, vector<1x128xf32>,
    return
  }
  func.func @transform_0(%arg0: i32) -> (i32, i32) {
    %c0_i32 = arith.constant 0 : i32
    %c0_i32_0 = arith.constant 0 : i32
    return %arg0, %c0_i32 : i32, i32
  }
  func.func @transform_1(%arg0: i32) -> (i32, i32) {
    %c0_i32 = arith.constant 0 : i32
    %c0_i32_0 = arith.constant 0 : i32
    %c0_i32_1 = arith.constant 0 : i32
    return %c0_i32, %c0_i32_0 : i32, i32
  }
  func.func @transform_2(%arg0: i32) -> (i32, i32) {
    %c0_i32 = arith.constant 0 : i32
    %c0_i32_0 = arith.constant 0 : i32
    %c0_i32_1 = arith.constant 0 : i32
    return %c0_i32, %c0_i32_0 : i32, i32
  }
  func.func @transform_3(%arg0: i32) -> (i32, i32) {
    %c0_i32 = arith.constant 0 : i32
    %c0_i32_0 = arith.constant 0 : i32
    %c0_i32_1 = arith.constant 0 : i32
    return %c0_i32, %c0_i32_0 : i32, i32
  }
  func.func @transform_4(%arg0: i32) -> (i32, i32) {
    %c0_i32 = arith.constant 0 : i32
    %c0_i32_0 = arith.constant 0 : i32
    %c0_i32_1 = arith.constant 0 : i32
    return %c0_i32, %c0_i32_0 : i32, i32
  }
  func.func @transform_5(%arg0: i32) -> (i32, i32) {
    %c0_i32 = arith.constant 0 : i32
    %c0_i32_0 = arith.constant 0 : i32
    return %c0_i32, %arg0 : i32, i32
  }
}

</mosaic_0001>

<llo_original>
// kernel: tpu_custom_call.1
$region0: #{tpu_custom_call.1}
  #allocation0 [shape = 'u32[]', space=smem, size = 0x4, offset = 0x4, fixed_abs, tag = 'smem constant byte address 0x4 - core index']
  #allocation1 [shape = 'u32[144,128]{1,0:T(1,128)}', space=vmem, size = 0x12000, scoped, tag = 'internal scratch']
  %s0 = inlined_call_operand.vmem [shape: f32[16,768], index: 0, kind: input, shape index: {}]
  %s1 = inlined_call_operand.vmem [shape: f32[768,64], index: 1, kind: input, shape index: {}]
  %s2 = inlined_call_operand.vmem [shape: f32[1,64], index: 2, kind: input, shape index: {}]
  %s3 = inlined_call_operand.vmem [shape: f32[64,128], index: 3, kind: input, shape index: {}]
  %s4 = inlined_call_operand.vmem [shape: f32[1,128], index: 4, kind: input, shape index: {}]
  %s5 = inlined_call_operand.hbm [shape: f32[1,16], index: 5, kind: output, shape index: {}]
  %s6 = sld [smem:[#allocation0]]
  $region30: #{tpu_custom_call.1} parent=0
    _
  %s8 = ssub.s32 1, %s6
  %s9 = scalar_select 0, %s8, %s6
  $region1: #{tpu_custom_call.1} parent=0
    #allocation2 [shape = 'u8[512]{0}', space=vmem, size = 0x400, scoped, tag = 'output window, operand 0, single buffered']
    #allocation3 [shape = 's32[1]{0}', space=sflag, size = 0x4, scoped, tag = 'scoped memory for tpu_custom_call.1']
    %10 = vsyncpa [#allocation3], 0
    // Predicated region
    $region2: #{tpu_custom_call.1} parent=1 // pred_check
      _
    $region3: #{tpu_custom_call.1} parent=1 // pred_check_branch
      %12 = sbr.rel (0) target = $region5
    $region4: #{tpu_custom_call.1} parent=1 // pred_region
      _
    $region5: #{tpu_custom_call.1} parent=1 // pred_fallthru
      _
    // Predicated region
    $region6: #{tpu_custom_call.1} parent=1 // pred_check
      _
    $region7: #{tpu_custom_call.1} parent=1 // pred_check_branch
      %14 = sbr.rel (0) target = $region9
    $region8: #{tpu_custom_call.1} parent=1 // pred_region
      _
    $region9: #{tpu_custom_call.1} parent=1 // pred_fallthru
      _
    // Predicated region
    $region10: #{tpu_custom_call.1} parent=1 // pred_check
      _
    $region11: #{tpu_custom_call.1} parent=1 // pred_check_branch
      %16 = sbr.rel (0) target = $region13
    $region12: #{tpu_custom_call.1} parent=1 // pred_region
      _
    $region13: #{tpu_custom_call.1} parent=1 // pred_fallthru
      _
    // Predicated region
    $region14: #{tpu_custom_call.1} parent=1 // pred_check
      _
    $region15: #{tpu_custom_call.1} parent=1 // pred_check_branch
      %18 = sbr.rel (0) target = $region17
    $region16: #{tpu_custom_call.1} parent=1 // pred_region
      _
    $region17: #{tpu_custom_call.1} parent=1 // pred_fallthru
      _
    // Predicated region
    $region18: #{tpu_custom_call.1} parent=1 // pred_check
      _
    $region19: #{tpu_custom_call.1} parent=1 // pred_check_branch
      %20 = sbr.rel (0) target = $region21
    $region20: #{tpu_custom_call.1} parent=1 // pred_region
      _
    $region21: #{tpu_custom_call.1} parent=1 // pred_fallthru
      _
    %v21 = vld [vmem:[%s0] sm:$0xff]
    %v22 = vld [vmem:[%s0 + $0x8] sm:$0xff]
    %v23 = vld [vmem:[%s0 + $0x10] sm:$0xff]
    %v24 = vld [vmem:[%s0 + $0x18] sm:$0xff]
    %v25 = vld [vmem:[%s0 + $0x20] sm:$0xff]
    %v26 = vld [vmem:[%s0 + $0x28] sm:$0xff]
    %v27 = vld [vmem:[%s0 + $0x30] sm:$0xff]
    %v28 = vld [vmem:[%s0 + $0x38] sm:$0xff]
    %v29 = vld [vmem:[%s0 + $0x40] sm:$0xff]
    %v30 = vld [vmem:[%s0 + $0x48] sm:$0xff]
    %v31 = vld [vmem:[%s0 + $0x50] sm:$0xff]
    %v32 = vld [vmem:[%s0 + $0x58] sm:$0xff]
    %v33 = vld [vmem:[%s0 + $0x60] sm:$0xff]
    %v34 = vld [vmem:[%s0 + $0x68] sm:$0xff]
    %v35 = vld [vmem:[%s0 + $0x70] sm:$0xff]
    %v36 = vld [vmem:[%s0 + $0x78] sm:$0xff]
    %v37 = vld [vmem:[%s0 + $0x80] sm:$0xff]
    %v38 = vld [vmem:[%s0 + $0x88] sm:$0xff]
    %v39 = vld [vmem:[%s0 + $0x90] sm:$0xff]
    %v40 = vld [vmem:[%s0 + $0x98] sm:$0xff]
    %v41 = vld [vmem:[%s0 + $0xa0] sm:$0xff]
    %v42 = vld [vmem:[%s0 + $0xa8] sm:$0xff]
    %v43 = vld [vmem:[%s0 + $0xb0] sm:$0xff]
    %v44 = vld [vmem:[%s0 + $0xb8] sm:$0xff]
    %v45 = vld [vmem:[%s0 + $0xc0] sm:$0xff]
    %v46 = vld [vmem:[%s0 + $0xc8] sm:$0xff]
    %v47 = vld [vmem:[%s0 + $0xd0] sm:$0xff]
    %v48 = vld [vmem:[%s0 + $0xd8] sm:$0xff]
    %v49 = vld [vmem:[%s0 + $0xe0] sm:$0xff]
    %v50 = vld [vmem:[%s0 + $0xe8] sm:$0xff]
    %v51 = vld [vmem:[%s0 + $0xf0] sm:$0xff]
    %v52 = vld [vmem:[%s0 + $0xf8] sm:$0xff]
    %v53 = vld [vmem:[%s0 + $0x100] sm:$0xff]
    %v54 = vld [vmem:[%s0 + $0x108] sm:$0xff]
    %v55 = vld [vmem:[%s0 + $0x110] sm:$0xff]
    %v56 = vld [vmem:[%s0 + $0x118] sm:$0xff]
    %v57 = vld [vmem:[%s0 + $0x120] sm:$0xff]
    %v58 = vld [vmem:[%s0 + $0x128] sm:$0xff]
    %v59 = vld [vmem:[%s0 + $0x130] sm:$0xff]
    %v60 = vld [vmem:[%s0 + $0x138] sm:$0xff]
    %v61 = vld [vmem:[%s0 + $0x140] sm:$0xff]
    %v62 = vld [vmem:[%s0 + $0x148] sm:$0xff]
    %v63 = vld [vmem:[%s0 + $0x150] sm:$0xff]
    %v64 = vld [vmem:[%s0 + $0x158] sm:$0xff]
    %v65 = vld [vmem:[%s0 + $0x160] sm:$0xff]
    %v66 = vld [vmem:[%s0 + $0x168] sm:$0xff]
    %v67 = vld [vmem:[%s0 + $0x170] sm:$0xff]
    %v68 = vld [vmem:[%s0 + $0x178] sm:$0xff]
    %v69 = vld [vmem:[%s0 + $0x180] sm:$0xff]
    %v70 = vld [vmem:[%s0 + $0x188] sm:$0xff]
    %v71 = vld [vmem:[%s0 + $0x190] sm:$0xff]
    %v72 = vld [vmem:[%s0 + $0x198] sm:$0xff]
    %v73 = vld [vmem:[%s0 + $0x1a0] sm:$0xff]
    %v74 = vld [vmem:[%s0 + $0x1a8] sm:$0xff]
    %v75 = vld [vmem:[%s0 + $0x1b0] sm:$0xff]
    %v76 = vld [vmem:[%s0 + $0x1b8] sm:$0xff]
    %v77 = vld [vmem:[%s0 + $0x1c0] sm:$0xff]
    %v78 = vld [vmem:[%s0 + $0x1c8] sm:$0xff]
    %v79 = vld [vmem:[%s0 + $0x1d0] sm:$0xff]
    %v80 = vld [vmem:[%s0 + $0x1d8] sm:$0xff]
    %v81 = vld [vmem:[%s0 + $0x1e0] sm:$0xff]
    %v82 = vld [vmem:[%s0 + $0x1e8] sm:$0xff]
    %v83 = vld [vmem:[%s0 + $0x1f0] sm:$0xff]
    %v84 = vld [vmem:[%s0 + $0x1f8] sm:$0xff]
    %v85 = vld [vmem:[%s0 + $0x200] sm:$0xff]
    %v86 = vld [vmem:[%s0 + $0x208] sm:$0xff]
    %v87 = vld [vmem:[%s0 + $0x210] sm:$0xff]
    %v88 = vld [vmem:[%s0 + $0x218] sm:$0xff]
    %v89 = vld [vmem:[%s0 + $0x220] sm:$0xff]
    %v90 = vld [vmem:[%s0 + $0x228] sm:$0xff]
    %v91 = vld [vmem:[%s0 + $0x230] sm:$0xff]
    %v92 = vld [vmem:[%s0 + $0x238] sm:$0xff]
    %v93 = vld [vmem:[%s0 + $0x240] sm:$0xff]
    %v94 = vld [vmem:[%s0 + $0x248] sm:$0xff]
    %v95 = vld [vmem:[%s0 + $0x250] sm:$0xff]
    %v96 = vld [vmem:[%s0 + $0x258] sm:$0xff]
    %v97 = vld [vmem:[%s0 + $0x260] sm:$0xff]
    %v98 = vld [vmem:[%s0 + $0x268] sm:$0xff]
    %v99 = vld [vmem:[%s0 + $0x270] sm:$0xff]
    %v100 = vld [vmem:[%s0 + $0x278] sm:$0xff]
    %v101 = vld [vmem:[%s0 + $0x280] sm:$0xff]
    %v102 = vld [vmem:[%s0 + $0x288] sm:$0xff]
    %v103 = vld [vmem:[%s0 + $0x290] sm:$0xff]
    %v104 = vld [vmem:[%s0 + $0x298] sm:$0xff]
    %v105 = vld [vmem:[%s0 + $0x2a0] sm:$0xff]
    %v106 = vld [vmem:[%s0 + $0x2a8] sm:$0xff]
    %v107 = vld [vmem:[%s0 + $0x2b0] sm:$0xff]
    %v108 = vld [vmem:[%s0 + $0x2b8] sm:$0xff]
    %v109 = vld [vmem:[%s0 + $0x2c0] sm:$0xff]
    %v110 = vld [vmem:[%s0 + $0x2c8] sm:$0xff]
    %v111 = vld [vmem:[%s0 + $0x2d0] sm:$0xff]
    %v112 = vld [vmem:[%s0 + $0x2d8] sm:$0xff]
    %v113 = vld [vmem:[%s0 + $0x2e0] sm:$0xff]
    %v114 = vld [vmem:[%s0 + $0x2e8] sm:$0xff]
    %v115 = vld [vmem:[%s0 + $0x2f0] sm:$0xff]
    %v116 = vld [vmem:[%s0 + $0x2f8] sm:$0xff]
    %v117 = vld [vmem:[%s1] sm:$0xff]
    %v118 = vld [vmem:[%s1 + $0x8] sm:$0xff]
    %v119 = vld [vmem:[%s1 + $0x10] sm:$0xff]
    %v120 = vld [vmem:[%s1 + $0x18] sm:$0xff]
    %v121 = vld [vmem:[%s1 + $0x20] sm:$0xff]
    %v122 = vld [vmem:[%s1 + $0x28] sm:$0xff]
    %v123 = vld [vmem:[%s1 + $0x30] sm:$0xff]
    %v124 = vld [vmem:[%s1 + $0x38] sm:$0xff]
    %v125 = vld [vmem:[%s1 + $0x40] sm:$0xff]
    %v126 = vld [vmem:[%s1 + $0x48] sm:$0xff]
    %v127 = vld [vmem:[%s1 + $0x50] sm:$0xff]
    %v128 = vld [vmem:[%s1 + $0x58] sm:$0xff]
    %v129 = vld [vmem:[%s1 + $0x60] sm:$0xff]
    %v130 = vld [vmem:[%s1 + $0x68] sm:$0xff]
    %v131 = vld [vmem:[%s1 + $0x70] sm:$0xff]
    %v132 = vld [vmem:[%s1 + $0x78] sm:$0xff]
    %v133 = vld [vmem:[%s1 + $0x80] sm:$0xff]
    %v134 = vld [vmem:[%s1 + $0x88] sm:$0xff]
    %v135 = vld [vmem:[%s1 + $0x90] sm:$0xff]
    %v136 = vld [vmem:[%s1 + $0x98] sm:$0xff]
    %v137 = vld [vmem:[%s1 + $0xa0] sm:$0xff]
    %v138 = vld [vmem:[%s1 + $0xa8] sm:$0xff]
    %v139 = vld [vmem:[%s1 + $0xb0] sm:$0xff]
    %v140 = vld [vmem:[%s1 + $0xb8] sm:$0xff]
    %v141 = vld [vmem:[%s1 + $0xc0] sm:$0xff]
    %v142 = vld [vmem:[%s1 + $0xc8] sm:$0xff]
    %v143 = vld [vmem:[%s1 + $0xd0] sm:$0xff]
    %v144 = vld [vmem:[%s1 + $0xd8] sm:$0xff]
    %v145 = vld [vmem:[%s1 + $0xe0] sm:$0xff]
    %v146 = vld [vmem:[%s1 + $0xe8] sm:$0xff]
    %v147 = vld [vmem:[%s1 + $0xf0] sm:$0xff]
    %v148 = vld [vmem:[%s1 + $0xf8] sm:$0xff]
    %v149 = vld [vmem:[%s1 + $0x100] sm:$0xff]
    %v150 = vld [vmem:[%s1 + $0x108] sm:$0xff]
    %v151 = vld [vmem:[%s1 + $0x110] sm:$0xff]
    %v152 = vld [vmem:[%s1 + $0x118] sm:$0xff]
    %v153 = vld [vmem:[%s1 + $0x120] sm:$0xff]
    %v154 = vld [vmem:[%s1 + $0x128] sm:$0xff]
    %v155 = vld [vmem:[%s1 + $0x130] sm:$0xff]
    %v156 = vld [vmem:[%s1 + $0x138] sm:$0xff]
    %v157 = vld [vmem:[%s1 + $0x140] sm:$0xff]
    %v158 = vld [vmem:[%s1 + $0x148] sm:$0xff]
    %v159 = vld [vmem:[%s1 + $0x150] sm:$0xff]
    %v160 = vld [vmem:[%s1 + $0x158] sm:$0xff]
    %v161 = vld [vmem:[%s1 + $0x160] sm:$0xff]
    %v162 = vld [vmem:[%s1 + $0x168] sm:$0xff]
    %v163 = vld [vmem:[%s1 + $0x170] sm:$0xff]
    %v164 = vld [vmem:[%s1 + $0x178] sm:$0xff]
    %v165 = vld [vmem:[%s1 + $0x180] sm:$0xff]
    %v166 = vld [vmem:[%s1 + $0x188] sm:$0xff]
    %v167 = vld [vmem:[%s1 + $0x190] sm:$0xff]
    %v168 = vld [vmem:[%s1 + $0x198] sm:$0xff]
    %v169 = vld [vmem:[%s1 + $0x1a0] sm:$0xff]
    %v170 = vld [vmem:[%s1 + $0x1a8] sm:$0xff]
    %v171 = vld [vmem:[%s1 + $0x1b0] sm:$0xff]
    %v172 = vld [vmem:[%s1 + $0x1b8] sm:$0xff]
    %v173 = vld [vmem:[%s1 + $0x1c0] sm:$0xff]
    %v174 = vld [vmem:[%s1 + $0x1c8] sm:$0xff]
    %v175 = vld [vmem:[%s1 + $0x1d0] sm:$0xff]
    %v176 = vld [vmem:[%s1 + $0x1d8] sm:$0xff]
    %v177 = vld [vmem:[%s1 + $0x1e0] sm:$0xff]
    %v178 = vld [vmem:[%s1 + $0x1e8] sm:$0xff]
    %v179 = vld [vmem:[%s1 + $0x1f0] sm:$0xff]
    %v180 = vld [vmem:[%s1 + $0x1f8] sm:$0xff]
    %v181 = vld [vmem:[%s1 + $0x200] sm:$0xff]
    %v182 = vld [vmem:[%s1 + $0x208] sm:$0xff]
    %v183 = vld [vmem:[%s1 + $0x210] sm:$0xff]
    %v184 = vld [vmem:[%s1 + $0x218] sm:$0xff]
    %v185 = vld [vmem:[%s1 + $0x220] sm:$0xff]
    %v186 = vld [vmem:[%s1 + $0x228] sm:$0xff]
    %v187 = vld [vmem:[%s1 + $0x230] sm:$0xff]
    %v188 = vld [vmem:[%s1 + $0x238] sm:$0xff]
    %v189 = vld [vmem:[%s1 + $0x240] sm:$0xff]
    %v190 = vld [vmem:[%s1 + $0x248] sm:$0xff]
    %v191 = vld [vmem:[%s1 + $0x250] sm:$0xff]
    %v192 = vld [vmem:[%s1 + $0x258] sm:$0xff]
    %v193 = vld [vmem:[%s1 + $0x260] sm:$0xff]
    %v194 = vld [vmem:[%s1 + $0x268] sm:$0xff]
    %v195 = vld [vmem:[%s1 + $0x270] sm:$0xff]
    %v196 = vld [vmem:[%s1 + $0x278] sm:$0xff]
    %v197 = vld [vmem:[%s1 + $0x280] sm:$0xff]
    %v198 = vld [vmem:[%s1 + $0x288] sm:$0xff]
    %v199 = vld [vmem:[%s1 + $0x290] sm:$0xff]
    %v200 = vld [vmem:[%s1 + $0x298] sm:$0xff]
    %v201 = vld [vmem:[%s1 + $0x2a0] sm:$0xff]
    %v202 = vld [vmem:[%s1 + $0x2a8] sm:$0xff]
    %v203 = vld [vmem:[%s1 + $0x2b0] sm:$0xff]
    %v204 = vld [vmem:[%s1 + $0x2b8] sm:$0xff]
    %v205 = vld [vmem:[%s1 + $0x2c0] sm:$0xff]
    %v206 = vld [vmem:[%s1 + $0x2c8] sm:$0xff]
    %v207 = vld [vmem:[%s1 + $0x2d0] sm:$0xff]
    %v208 = vld [vmem:[%s1 + $0x2d8] sm:$0xff]
    %v209 = vld [vmem:[%s1 + $0x2e0] sm:$0xff]
    %v210 = vld [vmem:[%s1 + $0x2e8] sm:$0xff]
    %v211 = vld [vmem:[%s1 + $0x2f0] sm:$0xff]
    %v212 = vld [vmem:[%s1 + $0x2f8] sm:$0xff]
    %v213 = vld [vmem:[%s2] sm:$0x1]
    %v215 = vlaneseq
    %v216 = vshrl.u32 %v215, 7
    %v217 = vsub.s32 0, %v216
    %v218 = vrot.slane %v213, %v217
    %220 = vmatprep.subr.mxu0 0.0
    %221 = vmatpush1.msra.mxu0 %v117
    %222 = vmatprep.subr.mxu0 0.0
    %223 = vmatpush1.msra.mxu0 %v118
    %224 = vmatprep.subr.mxu0 0.0
    %225 = vmatpush1.msra.mxu0 %v119
    %226 = vmatprep.subr.mxu0 0.0
    %227 = vmatpush1.msra.mxu0 %v120
    %228 = vmatprep.subr.mxu0 0.0
    %229 = vmatpush1.msra.mxu0 %v121
    %230 = vmatprep.subr.mxu0 0.0
    %231 = vmatpush1.msra.mxu0 %v122
    %232 = vmatprep.subr.mxu0 0.0
    %233 = vmatpush1.msra.mxu0 %v123
    %234 = vmatprep.subr.mxu0 0.0
    %235 = vmatpush1.msra.mxu0 %v124
    %236 = vmatprep.subr.mxu0 0.0
    %237 = vmatpush1.msra.mxu0 %v125
    %238 = vmatprep.subr.mxu0 0.0
    %239 = vmatpush1.msra.mxu0 %v126
    %240 = vmatprep.subr.mxu0 0.0
    %241 = vmatpush1.msra.mxu0 %v127
    %242 = vmatprep.subr.mxu0 0.0
    %243 = vmatpush1.msra.mxu0 %v128
    %244 = vmatprep.subr.mxu0 0.0
    %245 = vmatpush1.msra.mxu0 %v129
    %246 = vmatprep.subr.mxu0 0.0
    %247 = vmatpush1.msra.mxu0 %v130
    %248 = vmatprep.subr.mxu0 0.0
    %249 = vmatpush1.msra.mxu0 %v131
    %250 = vmatprep.subr.mxu0 0.0
    %251 = vmatpush1.msra.mxu0 %v132
    %252 = vmatprep.subr.mxu0 0.0
    %253 = vmatpush1.msra.mxu0 %v133
    %254 = vmatprep.subr.mxu0 0.0
    %255 = vmatpush1.msra.mxu0 %v134
    %256 = vmatprep.subr.mxu0 0.0
    %257 = vmatpush1.msra.mxu0 %v135
    %258 = vmatprep.subr.mxu0 0.0
    %259 = vmatpush1.msra.mxu0 %v136
    %260 = vmatprep.subr.mxu0 0.0
    %261 = vmatpush1.msra.mxu0 %v137
    %262 = vmatprep.subr.mxu0 0.0
    %263 = vmatpush1.msra.mxu0 %v138
    %264 = vmatprep.subr.mxu0 0.0
    %265 = vmatpush1.msra.mxu0 %v139
    %266 = vmatprep.subr.mxu0 0.0
    %267 = vmatpush1.msra.mxu0 %v140
    %268 = vmatprep.subr.mxu0 0.0
    %269 = vmatpush1.msra.mxu0 %v141
    %270 = vmatprep.subr.mxu0 0.0
    %271 = vmatpush1.msra.mxu0 %v142
    %272 = vmatprep.subr.mxu0 0.0
    %273 = vmatpush1.msra.mxu0 %v143
    %274 = vmatprep.subr.mxu0 0.0
    %275 = vmatpush1.msra.mxu0 %v144
    %276 = vmatprep.subr.mxu0 0.0
    %277 = vmatpush1.msra.mxu0 %v145
    %278 = vmatprep.subr.mxu0 0.0
    %279 = vmatpush1.msra.mxu0 %v146
    %280 = vmatprep.subr.mxu0 0.0
    %281 = vmatpush1.msra.mxu0 %v147
    %282 = vmatprep.subr.mxu0 0.0
    %283 = vmatpush1.msra.mxu0 %v148
    %284 = vmatprep.mubr.f32.mxu0 %v22
    %285 = vmatmul.mubr.f32.gmra.mrb[0].mxu0 %v21
    %v286 = vpop.f32.mrb[0].mxu0
    %v287 = vadd.f32 %v218, %v286
    %v288 = vpop.f32.mrb[0].mxu0
    %289 = vmatprep.mubr.f32.mxu0 %v28
    %290 = vmatmul.mubr.f32.gmra.mrb[0].mxu0 %v27
    %v291 = vpop.f32.mrb[0].mxu0
    %v292 = vadd.f32 %v218, %v291
    %v293 = vpop.f32.mrb[0].mxu0
    %294 = vmatprep.mubr.f32.mxu0 %v34
    %295 = vmatmul.mubr.f32.gmra.mrb[0].mxu0 %v33
    %v296 = vpop.f32.mrb[0].mxu0
    %v297 = vadd.f32 %v218, %v296
    %v298 = vpop.f32.mrb[0].mxu0
    %299 = vmatprep.mubr.f32.mxu0 %v40
    %300 = vmatmul.mubr.f32.gmra.mrb[0].mxu0 %v39
    %v301 = vpop.f32.mrb[0].mxu0
    %v302 = vadd.f32 %v218, %v301
    %v303 = vpop.f32.mrb[0].mxu0
    %304 = vmatprep.mubr.f32.mxu0 %v46
    %305 = vmatmul.mubr.f32.gmra.mrb[0].mxu0 %v45
    %v306 = vpop.f32.mrb[0].mxu0
    %v307 = vadd.f32 %v218, %v306
    %v308 = vpop.f32.mrb[0].mxu0
    %309 = vmatprep.mubr.f32.mxu0 %v52
    %310 = vmatmul.mubr.f32.gmra.mrb[0].mxu0 %v51
    %v311 = vpop.f32.mrb[0].mxu0
    %v312 = vadd.f32 %v218, %v311
    %v313 = vpop.f32.mrb[0].mxu0
    %314 = vmatprep.mubr.f32.mxu0 %v58
    %315 = vmatmul.mubr.f32.gmra.mrb[0].mxu0 %v57
    %v316 = vpop.f32.mrb[0].mxu0
    %v317 = vadd.f32 %v218, %v316
    %v318 = vpop.f32.mrb[0].mxu0
    %319 = vmatprep.mubr.f32.mxu0 %v64
    %320 = vmatmul.mubr.f32.gmra.mrb[0].mxu0 %v63
    %v321 = vpop.f32.mrb[0].mxu0
    %v322 = vadd.f32 %v218, %v321
    %v323 = vpop.f32.mrb[0].mxu0
    %324 = vmatprep.mubr.f32.mxu0 %v70
    %325 = vmatmul.mubr.f32.gmra.mrb[0].mxu0 %v69
    %v326 = vpop.f32.mrb[0].mxu0
    %v327 = vadd.f32 %v218, %v326
    %v328 = vpop.f32.mrb[0].mxu0
    %329 = vmatprep.mubr.f32.mxu0 %v76
    %330 = vmatmul.mubr.f32.gmra.mrb[0].mxu0 %v75
    %v331 = vpop.f32.mrb[0].mxu0
    %v332 = vadd.f32 %v218, %v331
    %v333 = vpop.f32.mrb[0].mxu0
    %334 = vmatprep.mubr.f32.mxu0 %v82
    %335 = vmatmul.mubr.f32.gmra.mrb[0].mxu0 %v81
    %v336 = vpop.f32.mrb[0].mxu0
    %v337 = vadd.f32 %v218, %v336
    %v338 = vpop.f32.mrb[0].mxu0
    %339 = vmatprep.mubr.f32.mxu0 %v88
    %340 = vmatmul.mubr.f32.gmra.mrb[0].mxu0 %v87
    %v341 = vpop.f32.mrb[0].mxu0
    %v342 = vadd.f32 %v218, %v341
    %v343 = vpop.f32.mrb[0].mxu0
    %344 = vmatprep.mubr.f32.mxu0 %v94
    %345 = vmatmul.mubr.f32.gmra.mrb[0].mxu0 %v93
    %v346 = vpop.f32.mrb[0].mxu0
    %v347 = vadd.f32 %v218, %v346
    %v348 = vpop.f32.mrb[0].mxu0
    %349 = vmatprep.mubr.f32.mxu0 %v100
    %350 = vmatmul.mubr.f32.gmra.mrb[0].mxu0 %v99
    %v351 = vpop.f32.mrb[0].mxu0
    %v352 = vadd.f32 %v218, %v351
    %v353 = vpop.f32.mrb[0].mxu0
    %354 = vmatprep.mubr.f32.mxu0 %v106
    %355 = vmatmul.mubr.f32.gmra.mrb[0].mxu0 %v105
    %v356 = vpop.f32.mrb[0].mxu0
    %v357 = vadd.f32 %v218, %v356
    %v358 = vpop.f32.mrb[0].mxu0
    %359 = vmatprep.mubr.f32.mxu0 %v112
    %360 = vmatmul.mubr.f32.gmra.mrb[0].mxu0 %v111
    %v361 = vpop.f32.mrb[0].mxu0
    %v362 = vadd.f32 %v218, %v361
    %v363 = vpop.f32.mrb[0].mxu0
    %364 = vdwg.mxu0
    %365 = vmatprep.subr.mxu0 0.0
    %366 = vmatpush1.msra.mxu0 %v149
    %367 = vmatprep.subr.mxu0 0.0
    %368 = vmatpush1.msra.mxu0 %v150
    %369 = vmatprep.subr.mxu0 0.0
    %370 = vmatpush1.msra.mxu0 %v151
    %371 = vmatprep.subr.mxu0 0.0
    %372 = vmatpush1.msra.mxu0 %v152
    %373 = vmatprep.subr.mxu0 0.0
    %374 = vmatpush1.msra.mxu0 %v153
    %375 = vmatprep.subr.mxu0 0.0
    %376 = vmatpush1.msra.mxu0 %v154
    %377 = vmatprep.subr.mxu0 0.0
    %378 = vmatpush1.msra.mxu0 %v155
    %379 = vmatprep.subr.mxu0 0.0
    %380 = vmatpush1.msra.mxu0 %v156
    %381 = vmatprep.subr.mxu0 0.0
    %382 = vmatpush1.msra.mxu0 %v157
    %383 = vmatprep.subr.mxu0 0.0
    %384 = vmatpush1.msra.mxu0 %v158
    %385 = vmatprep.subr.mxu0 0.0
    %386 = vmatpush1.msra.mxu0 %v159
    %387 = vmatprep.subr.mxu0 0.0
    %388 = vmatpush1.msra.mxu0 %v160
    %389 = vmatprep.subr.mxu0 0.0
    %390 = vmatpush1.msra.mxu0 %v161
    %391 = vmatprep.subr.mxu0 0.0
    %392 = vmatpush1.msra.mxu0 %v162
    %393 = vmatprep.subr.mxu0 0.0
    %394 = vmatpush1.msra.mxu0 %v163
    %395 = vmatprep.subr.mxu0 0.0
    %396 = vmatpush1.msra.mxu0 %v164
    %397 = vmatprep.subr.mxu0 0.0
    %398 = vmatpush1.msra.mxu0 %v165
    %399 = vmatprep.subr.mxu0 0.0
    %400 = vmatpush1.msra.mxu0 %v166
    %401 = vmatprep.subr.mxu0 0.0
    %402 = vmatpush1.msra.mxu0 %v167
    %403 = vmatprep.subr.mxu0 0.0
    %404 = vmatpush1.msra.mxu0 %v168
    %405 = vmatprep.subr.mxu0 0.0
    %406 = vmatpush1.msra.mxu0 %v169
    %407 = vmatprep.subr.mxu0 0.0
    %408 = vmatpush1.msra.mxu0 %v170
    %409 = vmatprep.subr.mxu0 0.0
    %410 = vmatpush1.msra.mxu0 %v171
    %411 = vmatprep.subr.mxu0 0.0
    %412 = vmatpush1.msra.mxu0 %v172
    %413 = vmatprep.subr.mxu0 0.0
    %414 = vmatpush1.msra.mxu0 %v173
    %415 = vmatprep.subr.mxu0 0.0
    %416 = vmatpush1.msra.mxu0 %v174
    %417 = vmatprep.subr.mxu0 0.0
    %418 = vmatpush1.msra.mxu0 %v175
    %419 = vmatprep.subr.mxu0 0.0
    %420 = vmatpush1.msra.mxu0 %v176
    %421 = vmatprep.subr.mxu0 0.0
    %422 = vmatpush1.msra.mxu0 %v177
    %423 = vmatprep.subr.mxu0 0.0
    %424 = vmatpush1.msra.mxu0 %v178
    %425 = vmatprep.subr.mxu0 0.0
    %426 = vmatpush1.msra.mxu0 %v179
    %427 = vmatprep.subr.mxu0 0.0
    %428 = vmatpush1.msra.mxu0 %v180
    %429 = vmatprep.mubr.f32.mxu0 %v24
    %430 = vmatmul.mubr.f32.gmra.mrb[0].mxu0 %v23
    %v431 = vpop.f32.mrb[0].mxu0
    %v432 = vadd.f32 %v287, %v431
    %v433 = vpop.f32.mrb[0].mxu0
    %434 = vmatprep.mubr.f32.mxu0 %v30
    %435 = vmatmul.mubr.f32.gmra.mrb[0].mxu0 %v29
    %v436 = vpop.f32.mrb[0].mxu0
    %v437 = vadd.f32 %v292, %v436
    %v438 = vpop.f32.mrb[0].mxu0
    %439 = vmatprep.mubr.f32.mxu0 %v36
    %440 = vmatmul.mubr.f32.gmra.mrb[0].mxu0 %v35
    %v441 = vpop.f32.mrb[0].mxu0
    %v442 = vadd.f32 %v297, %v441
    %v443 = vpop.f32.mrb[0].mxu0
    %444 = vmatprep.mubr.f32.mxu0 %v42
    %445 = vmatmul.mubr.f32.gmra.mrb[0].mxu0 %v41
    %v446 = vpop.f32.mrb[0].mxu0
    %v447 = vadd.f32 %v302, %v446
    %v448 = vpop.f32.mrb[0].mxu0
    %449 = vmatprep.mubr.f32.mxu0 %v48
    %450 = vmatmul.mubr.f32.gmra.mrb[0].mxu0 %v47
    %v451 = vpop.f32.mrb[0].mxu0
    %v452 = vadd.f32 %v307, %v451
    %v453 = vpop.f32.mrb[0].mxu0
    %454 = vmatprep.mubr.f32.mxu0 %v54
    %455 = vmatmul.mubr.f32.gmra.mrb[0].mxu0 %v53
    %v456 = vpop.f32.mrb[0].mxu0
    %v457 = vadd.f32 %v312, %v456
    %v458 = vpop.f32.mrb[0].mxu0
    %459 = vmatprep.mubr.f32.mxu0 %v60
    %460 = vmatmul.mubr.f32.gmra.mrb[0].mxu0 %v59
    %v461 = vpop.f32.mrb[0].mxu0
    %v462 = vadd.f32 %v317, %v461
    %v463 = vpop.f32.mrb[0].mxu0
    %464 = vmatprep.mubr.f32.mxu0 %v66
    %465 = vmatmul.mubr.f32.gmra.mrb[0].mxu0 %v65
    %v466 = vpop.f32.mrb[0].mxu0
    %v467 = vadd.f32 %v322, %v466
    %v468 = vpop.f32.mrb[0].mxu0
    %469 = vmatprep.mubr.f32.mxu0 %v72
    %470 = vmatmul.mubr.f32.gmra.mrb[0].mxu0 %v71
    %v471 = vpop.f32.mrb[0].mxu0
    %v472 = vadd.f32 %v327, %v471
    %v473 = vpop.f32.mrb[0].mxu0
    %474 = vmatprep.mubr.f32.mxu0 %v78
    %475 = vmatmul.mubr.f32.gmra.mrb[0].mxu0 %v77
    %v476 = vpop.f32.mrb[0].mxu0
    %v477 = vadd.f32 %v332, %v476
    %v478 = vpop.f32.mrb[0].mxu0
    %479 = vmatprep.mubr.f32.mxu0 %v84
    %480 = vmatmul.mubr.f32.gmra.mrb[0].mxu0 %v83
    %v481 = vpop.f32.mrb[0].mxu0
    %v482 = vadd.f32 %v337, %v481
    %v483 = vpop.f32.mrb[0].mxu0
    %484 = vmatprep.mubr.f32.mxu0 %v90
    %485 = vmatmul.mubr.f32.gmra.mrb[0].mxu0 %v89
    %v486 = vpop.f32.mrb[0].mxu0
    %v487 = vadd.f32 %v342, %v486
    %v488 = vpop.f32.mrb[0].mxu0
    %489 = vmatprep.mubr.f32.mxu0 %v96
    %490 = vmatmul.mubr.f32.gmra.mrb[0].mxu0 %v95
    %v491 = vpop.f32.mrb[0].mxu0
    %v492 = vadd.f32 %v347, %v491
    %v493 = vpop.f32.mrb[0].mxu0
    %494 = vmatprep.mubr.f32.mxu0 %v102
    %495 = vmatmul.mubr.f32.gmra.mrb[0].mxu0 %v101
    %v496 = vpop.f32.mrb[0].mxu0
    %v497 = vadd.f32 %v352, %v496
    %v498 = vpop.f32.mrb[0].mxu0
    %499 = vmatprep.mubr.f32.mxu0 %v108
    %500 = vmatmul.mubr.f32.gmra.mrb[0].mxu0 %v107
    %v501 = vpop.f32.mrb[0].mxu0
    %v502 = vadd.f32 %v357, %v501
    %v503 = vpop.f32.mrb[0].mxu0
    %504 = vmatprep.mubr.f32.mxu0 %v114
    %505 = vmatmul.mubr.f32.gmra.mrb[0].mxu0 %v113
    %v506 = vpop.f32.mrb[0].mxu0
    %v507 = vadd.f32 %v362, %v506
    %v508 = vpop.f32.mrb[0].mxu0
    %509 = vdwg.mxu0
    %510 = vmatprep.subr.mxu0 0.0
    %511 = vmatpush1.msra.mxu0 %v181
    %512 = vmatprep.subr.mxu0 0.0
    %513 = vmatpush1.msra.mxu0 %v182
    %514 = vmatprep.subr.mxu0 0.0
    %515 = vmatpush1.msra.mxu0 %v183
    %516 = vmatprep.subr.mxu0 0.0
    %517 = vmatpush1.msra.mxu0 %v184
    %518 = vmatprep.subr.mxu0 0.0
    %519 = vmatpush1.msra.mxu0 %v185
    %520 = vmatprep.subr.mxu0 0.0
    %521 = vmatpush1.msra.mxu0 %v186
    %522 = vmatprep.subr.mxu0 0.0
    %523 = vmatpush1.msra.mxu0 %v187
    %524 = vmatprep.subr.mxu0 0.0
    %525 = vmatpush1.msra.mxu0 %v188
    %526 = vmatprep.subr.mxu0 0.0
    %527 = vmatpush1.msra.mxu0 %v189
    %528 = vmatprep.subr.mxu0 0.0
    %529 = vmatpush1.msra.mxu0 %v190
    %530 = vmatprep.subr.mxu0 0.0
    %531 = vmatpush1.msra.mxu0 %v191
    %532 = vmatprep.subr.mxu0 0.0
    %533 = vmatpush1.msra.mxu0 %v192
    %534 = vmatprep.subr.mxu0 0.0
    %535 = vmatpush1.msra.mxu0 %v193
    %536 = vmatprep.subr.mxu0 0.0
    %537 = vmatpush1.msra.mxu0 %v194
    %538 = vmatprep.subr.mxu0 0.0
    %539 = vmatpush1.msra.mxu0 %v195
    %540 = vmatprep.subr.mxu0 0.0
    %541 = vmatpush1.msra.mxu0 %v196
    %542 = vmatprep.subr.mxu0 0.0
    %543 = vmatpush1.msra.mxu0 %v197
    %544 = vmatprep.subr.mxu0 0.0
    %545 = vmatpush1.msra.mxu0 %v198
    %546 = vmatprep.subr.mxu0 0.0
    %547 = vmatpush1.msra.mxu0 %v199
    %548 = vmatprep.subr.mxu0 0.0
    %549 = vmatpush1.msra.mxu0 %v200
    %550 = vmatprep.subr.mxu0 0.0
    %551 = vmatpush1.msra.mxu0 %v201
    %552 = vmatprep.subr.mxu0 0.0
    %553 = vmatpush1.msra.mxu0 %v202
    %554 = vmatprep.subr.mxu0 0.0
    %555 = vmatpush1.msra.mxu0 %v203
    %556 = vmatprep.subr.mxu0 0.0
    %557 = vmatpush1.msra.mxu0 %v204
    %558 = vmatprep.subr.mxu0 0.0
    %559 = vmatpush1.msra.mxu0 %v205
    %560 = vmatprep.subr.mxu0 0.0
    %561 = vmatpush1.msra.mxu0 %v206
    %562 = vmatprep.subr.mxu0 0.0
    %563 = vmatpush1.msra.mxu0 %v207
    %564 = vmatprep.subr.mxu0 0.0
    %565 = vmatpush1.msra.mxu0 %v208
    %566 = vmatprep.subr.mxu0 0.0
    %567 = vmatpush1.msra.mxu0 %v209
    %568 = vmatprep.subr.mxu0 0.0
    %569 = vmatpush1.msra.mxu0 %v210
    %570 = vmatprep.subr.mxu0 0.0
    %571 = vmatpush1.msra.mxu0 %v211
    %572 = vmatprep.subr.mxu0 0.0
    %573 = vmatpush1.msra.mxu0 %v212
    %574 = vmatprep.mubr.f32.mxu0 %v26
    %575 = vmatmul.mubr.f32.gmra.mrb[0].mxu0 %v25
    %v576 = vpop.f32.mrb[0].mxu0
    %v577 = vadd.f32 %v432, %v576
    %v578 = vpop.f32.mrb[0].mxu0
    %579 = vmatprep.mubr.f32.mxu0 %v32
    %580 = vmatmul.mubr.f32.gmra.mrb[0].mxu0 %v31
    %v581 = vpop.f32.mrb[0].mxu0
    %v582 = vadd.f32 %v437, %v581
    %v583 = vpop.f32.mrb[0].mxu0
    %584 = vmatprep.mubr.f32.mxu0 %v38
    %585 = vmatmul.mubr.f32.gmra.mrb[0].mxu0 %v37
    %v586 = vpop.f32.mrb[0].mxu0
    %v587 = vadd.f32 %v442, %v586
    %v588 = vpop.f32.mrb[0].mxu0
    %589 = vmatprep.mubr.f32.mxu0 %v44
    %590 = vmatmul.mubr.f32.gmra.mrb[0].mxu0 %v43
    %v591 = vpop.f32.mrb[0].mxu0
    %v592 = vadd.f32 %v447, %v591
    %v593 = vpop.f32.mrb[0].mxu0
    %594 = vmatprep.mubr.f32.mxu0 %v50
    %595 = vmatmul.mubr.f32.gmra.mrb[0].mxu0 %v49
    %v596 = vpop.f32.mrb[0].mxu0
    %v597 = vadd.f32 %v452, %v596
    %v598 = vpop.f32.mrb[0].mxu0
    %599 = vmatprep.mubr.f32.mxu0 %v56
    %600 = vmatmul.mubr.f32.gmra.mrb[0].mxu0 %v55
    %v601 = vpop.f32.mrb[0].mxu0
    %v602 = vadd.f32 %v457, %v601
    %v603 = vpop.f32.mrb[0].mxu0
    %604 = vmatprep.mubr.f32.mxu0 %v62
    %605 = vmatmul.mubr.f32.gmra.mrb[0].mxu0 %v61
    %v606 = vpop.f32.mrb[0].mxu0
    %v607 = vadd.f32 %v462, %v606
    %v608 = vpop.f32.mrb[0].mxu0
    %609 = vmatprep.mubr.f32.mxu0 %v68
    %610 = vmatmul.mubr.f32.gmra.mrb[0].mxu0 %v67
    %v611 = vpop.f32.mrb[0].mxu0
    %v612 = vadd.f32 %v467, %v611
    %v613 = vpop.f32.mrb[0].mxu0
    %614 = vmatprep.mubr.f32.mxu0 %v74
    %615 = vmatmul.mubr.f32.gmra.mrb[0].mxu0 %v73
    %v616 = vpop.f32.mrb[0].mxu0
    %v617 = vadd.f32 %v472, %v616
    %v618 = vpop.f32.mrb[0].mxu0
    %619 = vmatprep.mubr.f32.mxu0 %v80
    %620 = vmatmul.mubr.f32.gmra.mrb[0].mxu0 %v79
    %v621 = vpop.f32.mrb[0].mxu0
    %v622 = vadd.f32 %v477, %v621
    %v623 = vpop.f32.mrb[0].mxu0
    %624 = vmatprep.mubr.f32.mxu0 %v86
    %625 = vmatmul.mubr.f32.gmra.mrb[0].mxu0 %v85
    %v626 = vpop.f32.mrb[0].mxu0
    %v627 = vadd.f32 %v482, %v626
    %v628 = vpop.f32.mrb[0].mxu0
    %629 = vmatprep.mubr.f32.mxu0 %v92
    %630 = vmatmul.mubr.f32.gmra.mrb[0].mxu0 %v91
    %v631 = vpop.f32.mrb[0].mxu0
    %v632 = vadd.f32 %v487, %v631
    %v633 = vpop.f32.mrb[0].mxu0
    %634 = vmatprep.mubr.f32.mxu0 %v98
    %635 = vmatmul.mubr.f32.gmra.mrb[0].mxu0 %v97
    %v636 = vpop.f32.mrb[0].mxu0
    %v637 = vadd.f32 %v492, %v636
    %v638 = vpop.f32.mrb[0].mxu0
    %639 = vmatprep.mubr.f32.mxu0 %v104
    %640 = vmatmul.mubr.f32.gmra.mrb[0].mxu0 %v103
    %v641 = vpop.f32.mrb[0].mxu0
    %v642 = vadd.f32 %v497, %v641
    %v643 = vpop.f32.mrb[0].mxu0
    %644 = vmatprep.mubr.f32.mxu0 %v110
    %645 = vmatmul.mubr.f32.gmra.mrb[0].mxu0 %v109
    %v646 = vpop.f32.mrb[0].mxu0
    %v647 = vadd.f32 %v502, %v646
    %v648 = vpop.f32.mrb[0].mxu0
    %649 = vmatprep.mubr.f32.mxu0 %v116
    %650 = vmatmul.mubr.f32.gmra.mrb[0].mxu0 %v115
    %v651 = vpop.f32.mrb[0].mxu0
    %v652 = vadd.f32 %v507, %v651
    %v653 = vpop.f32.mrb[0].mxu0
    %654 = vdwg.mxu0
    %v655 = vmul.f32 %v577, 0.5
    %v656 = vmul.f32 %v582, 0.5
    %v657 = vmul.f32 %v587, 0.5
    %v658 = vmul.f32 %v592, 0.5
    %v659 = vmul.f32 %v597, 0.5
    %v660 = vmul.f32 %v602, 0.5
    %v661 = vmul.f32 %v607, 0.5
    %v662 = vmul.f32 %v612, 0.5
    %v663 = vmul.f32 %v617, 0.5
    %v664 = vmul.f32 %v622, 0.5
    %v665 = vmul.f32 %v627, 0.5
    %v666 = vmul.f32 %v632, 0.5
    %v667 = vmul.f32 %v637, 0.5
    %v668 = vmul.f32 %v642, 0.5
    %v669 = vmul.f32 %v647, 0.5
    %v670 = vmul.f32 %v652, 0.5
    %v671 = vmul.f32 %v577, 0.70710677
    %v672 = vmul.f32 %v582, 0.70710677
    %v673 = vmul.f32 %v587, 0.70710677
    %v674 = vmul.f32 %v592, 0.70710677
    %v675 = vmul.f32 %v597, 0.70710677
    %v676 = vmul.f32 %v602, 0.70710677
    %v677 = vmul.f32 %v607, 0.70710677
    %v678 = vmul.f32 %v612, 0.70710677
    %v679 = vmul.f32 %v617, 0.70710677
    %v680 = vmul.f32 %v622, 0.70710677
    %v681 = vmul.f32 %v627, 0.70710677
    %v682 = vmul.f32 %v632, 0.70710677
    %v683 = vmul.f32 %v637, 0.70710677
    %v684 = vmul.f32 %v642, 0.70710677
    %v685 = vmul.f32 %v647, 0.70710677
    %v686 = vmul.f32 %v652, 0.70710677
    %v687 = verf.f32.pop %v671
    %v688 = verf.f32.pop %v672
    %v689 = verf.f32.pop %v673
    %v690 = verf.f32.pop %v674
    %v691 = verf.f32.pop %v675
    %v692 = verf.f32.pop %v676
    %v693 = verf.f32.pop %v677
    %v694 = verf.f32.pop %v678
    %v695 = verf.f32.pop %v679
    %v696 = verf.f32.pop %v680
    %v697 = verf.f32.pop %v681
    %v698 = verf.f32.pop %v682
    %v699 = verf.f32.pop %v683
    %v700 = verf.f32.pop %v684
    %v701 = verf.f32.pop %v685
    %v702 = verf.f32.pop %v686
    %v703 = vadd.f32 %v687, 1.0
    %v704 = vadd.f32 %v688, 1.0
    %v705 = vadd.f32 %v689, 1.0
    %v706 = vadd.f32 %v690, 1.0
    %v707 = vadd.f32 %v691, 1.0
    %v708 = vadd.f32 %v692, 1.0
    %v709 = vadd.f32 %v693, 1.0
    %v710 = vadd.f32 %v694, 1.0
    %v711 = vadd.f32 %v695, 1.0
    %v712 = vadd.f32 %v696, 1.0
    %v713 = vadd.f32 %v697, 1.0
    %v714 = vadd.f32 %v698, 1.0
    %v715 = vadd.f32 %v699, 1.0
    %v716 = vadd.f32 %v700, 1.0
    %v717 = vadd.f32 %v701, 1.0
    %v718 = vadd.f32 %v702, 1.0
    %v719 = vmul.f32 %v655, %v703
    %v720 = vmul.f32 %v656, %v704
    %v721 = vmul.f32 %v657, %v705
    %v722 = vmul.f32 %v658, %v706
    %v723 = vmul.f32 %v659, %v707
    %v724 = vmul.f32 %v660, %v708
    %v725 = vmul.f32 %v661, %v709
    %v726 = vmul.f32 %v662, %v710
    %v727 = vmul.f32 %v663, %v711
    %v728 = vmul.f32 %v664, %v712
    %v729 = vmul.f32 %v665, %v713
    %v730 = vmul.f32 %v666, %v714
    %v731 = vmul.f32 %v667, %v715
    %v732 = vmul.f32 %v668, %v716
    %v733 = vmul.f32 %v669, %v717
    %v734 = vmul.f32 %v670, %v718
    %v735 = vld [vmem:[%s3] sm:$0xff]
    %v736 = vld [vmem:[%s3 + $0x8] sm:$0xff]
    %v737 = vld [vmem:[%s3 + $0x10] sm:$0xff]
    %v738 = vld [vmem:[%s3 + $0x18] sm:$0xff]
    %v739 = vld [vmem:[%s3 + $0x20] sm:$0xff]
    %v740 = vld [vmem:[%s3 + $0x28] sm:$0xff]
    %v741 = vld [vmem:[%s3 + $0x30] sm:$0xff]
    %v742 = vld [vmem:[%s3 + $0x38] sm:$0xff]
    %v743 = vld [vmem:[%s4] sm:$0x1]
    %v745 = vlaneseq
    %v746 = vshrl.u32 %v745, 7
    %v747 = vsub.s32 0, %v746
    %v748 = vrot.slane %v743, %v747
    %vm750 = vcmask 523264
    %v752 = vsel %vm750, %v719, 0
    %v755 = vsel %vm750, %v720, 0
    %v758 = vsel %vm750, %v721, 0
    %v761 = vsel %vm750, %v722, 0
    %v764 = vsel %vm750, %v723, 0
    %v767 = vsel %vm750, %v724, 0
    %v770 = vsel %vm750, %v725, 0
    %v773 = vsel %vm750, %v726, 0
    %v776 = vsel %vm750, %v727, 0
    %v779 = vsel %vm750, %v728, 0
    %v782 = vsel %vm750, %v729, 0
    %v785 = vsel %vm750, %v730, 0
    %v788 = vsel %vm750, %v731, 0
    %v791 = vsel %vm750, %v732, 0
    %v794 = vsel %vm750, %v733, 0
    %v797 = vsel %vm750, %v734, 0
    %799 = vmatprep.subr.mxu0 0.0
    %800 = vmatpush1.msra.mxu0 %v735
    %801 = vmatprep.subr.mxu0 0.0
    %802 = vmatpush1.msra.mxu0 %v736
    %803 = vmatprep.subr.mxu0 0.0
    %804 = vmatpush1.msra.mxu0 %v737
    %805 = vmatprep.subr.mxu0 0.0
    %806 = vmatpush1.msra.mxu0 %v738
    %807 = vmatprep.subr.mxu0 0.0
    %808 = vmatpush1.msra.mxu0 %v739
    %809 = vmatprep.subr.mxu0 0.0
    %810 = vmatpush1.msra.mxu0 %v740
    %811 = vmatprep.subr.mxu0 0.0
    %812 = vmatpush1.msra.mxu0 %v741
    %813 = vmatprep.subr.mxu0 0.0
    %814 = vmatpush1.msra.mxu0 %v742
    %815 = vmatprep.subr.mxu0 0.0
    %816 = vmatpush1.msra.mxu0 0.0
    %817 = vmatprep.subr.mxu0 0.0
    %818 = vmatpush1.msra.mxu0 0.0
    %819 = vmatprep.subr.mxu0 0.0
    %820 = vmatpush1.msra.mxu0 0.0
    %821 = vmatprep.subr.mxu0 0.0
    %822 = vmatpush1.msra.mxu0 0.0
    %823 = vmatprep.subr.mxu0 0.0
    %824 = vmatpush1.msra.mxu0 0.0
    %825 = vmatprep.subr.mxu0 0.0
    %826 = vmatpush1.msra.mxu0 0.0
    %827 = vmatprep.subr.mxu0 0.0
    %828 = vmatpush1.msra.mxu0 0.0
    %829 = vmatprep.subr.mxu0 0.0
    %830 = vmatpush1.msra.mxu0 0.0
    %831 = vmatprep.subr.mxu0 0.0
    %832 = vmatpush1.msra.mxu0 0.0
    %833 = vmatprep.subr.mxu0 0.0
    %834 = vmatpush1.msra.mxu0 0.0
    %835 = vmatprep.subr.mxu0 0.0
    %836 = vmatpush1.msra.mxu0 0.0
    %837 = vmatprep.subr.mxu0 0.0
    %838 = vmatpush1.msra.mxu0 0.0
    %839 = vmatprep.subr.mxu0 0.0
    %840 = vmatpush1.msra.mxu0 0.0
    %841 = vmatprep.subr.mxu0 0.0
    %842 = vmatpush1.msra.mxu0 0.0
    %843 = vmatprep.subr.mxu0 0.0
    %844 = vmatpush1.msra.mxu0 0.0
    %845 = vmatprep.subr.mxu0 0.0
    %846 = vmatpush1.msra.mxu0 0.0
    %847 = vmatprep.subr.mxu0 0.0
    %848 = vmatpush1.msra.mxu0 0.0
    %849 = vmatprep.subr.mxu0 0.0
    %850 = vmatpush1.msra.mxu0 0.0
    %851 = vmatprep.subr.mxu0 0.0
    %852 = vmatpush1.msra.mxu0 0.0
    %853 = vmatprep.subr.mxu0 0.0
    %854 = vmatpush1.msra.mxu0 0.0
    %855 = vmatprep.subr.mxu0 0.0
    %856 = vmatpush1.msra.mxu0 0.0
    %857 = vmatprep.subr.mxu0 0.0
    %858 = vmatpush1.msra.mxu0 0.0
    %859 = vmatprep.subr.mxu0 0.0
    %860 = vmatpush1.msra.mxu0 0.0
    %861 = vmatprep.subr.mxu0 0.0
    %862 = vmatpush1.msra.mxu0 0.0
    %863 = vmatprep.mubr.f32.mxu0 0.0
    %864 = vmatmul.mubr.f32.gmra.mrb[0].mxu0 %v752
    %v865 = vpop.f32.mrb[0].mxu0
    %v866 = vadd.f32 %v748, %v865
    %v867 = vpop.f32.mrb[0].mxu0
    %868 = vmatprep.mubr.f32.mxu0 0.0
    %869 = vmatmul.mubr.f32.gmra.mrb[0].mxu0 %v755
    %v870 = vpop.f32.mrb[0].mxu0
    %v871 = vadd.f32 %v748, %v870
    %v872 = vpop.f32.mrb[0].mxu0
    %873 = vmatprep.mubr.f32.mxu0 0.0
    %874 = vmatmul.mubr.f32.gmra.mrb[0].mxu0 %v758
    %v875 = vpop.f32.mrb[0].mxu0
    %v876 = vadd.f32 %v748, %v875
    %v877 = vpop.f32.mrb[0].mxu0
    %878 = vmatprep.mubr.f32.mxu0 0.0
    %879 = vmatmul.mubr.f32.gmra.mrb[0].mxu0 %v761
    %v880 = vpop.f32.mrb[0].mxu0
    %v881 = vadd.f32 %v748, %v880
    %v882 = vpop.f32.mrb[0].mxu0
    %883 = vmatprep.mubr.f32.mxu0 0.0
    %884 = vmatmul.mubr.f32.gmra.mrb[0].mxu0 %v764
    %v885 = vpop.f32.mrb[0].mxu0
    %v886 = vadd.f32 %v748, %v885
    %v887 = vpop.f32.mrb[0].mxu0
    %888 = vmatprep.mubr.f32.mxu0 0.0
    %889 = vmatmul.mubr.f32.gmra.mrb[0].mxu0 %v767
    %v890 = vpop.f32.mrb[0].mxu0
    %v891 = vadd.f32 %v748, %v890
    %v892 = vpop.f32.mrb[0].mxu0
    %893 = vmatprep.mubr.f32.mxu0 0.0
    %894 = vmatmul.mubr.f32.gmra.mrb[0].mxu0 %v770
    %v895 = vpop.f32.mrb[0].mxu0
    %v896 = vadd.f32 %v748, %v895
    %v897 = vpop.f32.mrb[0].mxu0
    %898 = vmatprep.mubr.f32.mxu0 0.0
    %899 = vmatmul.mubr.f32.gmra.mrb[0].mxu0 %v773
    %v900 = vpop.f32.mrb[0].mxu0
    %v901 = vadd.f32 %v748, %v900
    %v902 = vpop.f32.mrb[0].mxu0
    %903 = vmatprep.mubr.f32.mxu0 0.0
    %904 = vmatmul.mubr.f32.gmra.mrb[0].mxu0 %v776
    %v905 = vpop.f32.mrb[0].mxu0
    %v906 = vadd.f32 %v748, %v905
    %v907 = vpop.f32.mrb[0].mxu0
    %908 = vmatprep.mubr.f32.mxu0 0.0
    %909 = vmatmul.mubr.f32.gmra.mrb[0].mxu0 %v779
    %v910 = vpop.f32.mrb[0].mxu0
    %v911 = vadd.f32 %v748, %v910
    %v912 = vpop.f32.mrb[0].mxu0
    %913 = vmatprep.mubr.f32.mxu0 0.0
    %914 = vmatmul.mubr.f32.gmra.mrb[0].mxu0 %v782
    %v915 = vpop.f32.mrb[0].mxu0
    %v916 = vadd.f32 %v748, %v915
    %v917 = vpop.f32.mrb[0].mxu0
    %918 = vmatprep.mubr.f32.mxu0 0.0
    %919 = vmatmul.mubr.f32.gmra.mrb[0].mxu0 %v785
    %v920 = vpop.f32.mrb[0].mxu0
    %v921 = vadd.f32 %v748, %v920
    %v922 = vpop.f32.mrb[0].mxu0
    %923 = vmatprep.mubr.f32.mxu0 0.0
    %924 = vmatmul.mubr.f32.gmra.mrb[0].mxu0 %v788
    %v925 = vpop.f32.mrb[0].mxu0
    %v926 = vadd.f32 %v748, %v925
    %v927 = vpop.f32.mrb[0].mxu0
    %928 = vmatprep.mubr.f32.mxu0 0.0
    %929 = vmatmul.mubr.f32.gmra.mrb[0].mxu0 %v791
    %v930 = vpop.f32.mrb[0].mxu0
    %v931 = vadd.f32 %v748, %v930
    %v932 = vpop.f32.mrb[0].mxu0
    %933 = vmatprep.mubr.f32.mxu0 0.0
    %934 = vmatmul.mubr.f32.gmra.mrb[0].mxu0 %v794
    %v935 = vpop.f32.mrb[0].mxu0
    %v936 = vadd.f32 %v748, %v935
    %v937 = vpop.f32.mrb[0].mxu0
    %938 = vmatprep.mubr.f32.mxu0 0.0
    %939 = vmatmul.mubr.f32.gmra.mrb[0].mxu0 %v797
    %v940 = vpop.f32.mrb[0].mxu0
    %v941 = vadd.f32 %v748, %v940
    %v942 = vpop.f32.mrb[0].mxu0
    %943 = vdwg.mxu0
    %944 = vxpose.xlu0.b32.start [1/16] %v866, 128
    %945 = vxpose.xlu0.b32.cont [2/16] %v871, 128
    %946 = vxpose.xlu0.b32.cont [3/16] %v876, 128
    %947 = vxpose.xlu0.b32.cont [4/16] %v881, 128
    %948 = vxpose.xlu0.b32.cont [5/16] %v886, 128
    %949 = vxpose.xlu0.b32.cont [6/16] %v891, 128
    %950 = vxpose.xlu0.b32.cont [7/16] %v896, 128
    %951 = vxpose.xlu0.b32.cont [8/16] %v901, 128
    %952 = vxpose.xlu0.b32.cont [9/16] %v906, 128
    %953 = vxpose.xlu0.b32.cont [10/16] %v911, 128
    %954 = vxpose.xlu0.b32.cont [11/16] %v916, 128
    %955 = vxpose.xlu0.b32.cont [12/16] %v921, 128
    %956 = vxpose.xlu0.b32.cont [13/16] %v926, 128
    %957 = vxpose.xlu0.b32.cont [14/16] %v931, 128
    %958 = vxpose.xlu0.b32.cont [15/16] %v936, 128
    %959 = vxpose.xlu0.b32.end [16/16] %v941, 128
    %v960 = vpop.trf.xlu0
    %v961 = vpop.trf.xlu0
    %v962 = vpop.trf.xlu0
    %v963 = vpop.trf.xlu0
    %v964 = vpop.trf.xlu0
    %v965 = vpop.trf.xlu0
    %v966 = vpop.trf.xlu0
    %v967 = vpop.trf.xlu0
    %v968 = vpop.trf.xlu0
    %v969 = vpop.trf.xlu0
    %v970 = vpop.trf.xlu0
    %v971 = vpop.trf.xlu0
    %v972 = vpop.trf.xlu0
    %v973 = vpop.trf.xlu0
    %v974 = vpop.trf.xlu0
    %v975 = vpop.trf.xlu0
    %976 = vst [vmem:[#allocation2] sm:$0x1] %v960
    // Predicated region
    $region22: #{tpu_custom_call.1} parent=1 // pred_check
      _
    $region23: #{tpu_custom_call.1} parent=1 // pred_check_branch
      %978 = sbr.rel (0) target = $region25
    $region24: #{tpu_custom_call.1} parent=1 // pred_region
      %s980 = ssub.s32 16, 16
      %981 = vsyncadd [#allocation3], %s980
      %s983 = sshll.u32 [#allocation2], 4
      %s984 = int_to_ptr.vmem [resolvable:$true] %s983
      %986 = dma.vmem_to_hbm [thread:$0]  %s984, 16, %s5, [#allocation3]
    $region25: #{tpu_custom_call.1} parent=1 // pred_fallthru
      _
    // Predicated region
    $region26: #{tpu_custom_call.1} parent=1 // pred_check
      _
    $region27: #{tpu_custom_call.1} parent=1 // pred_check_branch
      %988 = sbr.rel (0) target = $region29
    $region28: #{tpu_custom_call.1} parent=1 // pred_region
      %989 = dma.done [#allocation3], 16
    $region29: #{tpu_custom_call.1} parent=1 // pred_fallthru
      _
    %990 = vsyncpa [#allocation3], 1

</llo_original>
